<compile_context>
chip_gen: v7x
topology: tpu7x:2x2x1
jax: 0.10.0
libtpu: 0.0.40
codegen_flags: <defaults>
</compile_context>

<pallas_src>
import jax
import jax.numpy as jnp
from jax.experimental import pallas as pl
from jax.experimental.pallas import tpu as pltpu


def _pointwise_conv_kernel(w_ref, b_ref, x_ref, o_ref):
    # w_ref: (C_out, C_in)
    # b_ref: (C_out, 1)
    # x_ref: (C_in, TILE_T)   -- channels on sublanes, time on lanes
    # o_ref: (C_out, TILE_T)  -- lane-dense output tile
    acc = jnp.dot(w_ref[...], x_ref[...], preferred_element_type=jnp.float32)
    o_ref[...] = (acc + b_ref[...]).astype(o_ref.dtype)


def _choose_tile_t(T, C_in, C_out, dtype_bytes,
                   vmem_budget_bytes=12 * 1024 * 1024, max_tile=2048):
    """Pick a lane tile over time: multiple of 128, sized to a VMEM budget.

    The budget covers the double-buffered x and output tiles.  If the whole
    time axis fits under the cap, use it directly (a block equal to the full
    array dim is always legal, avoids ragged masking, and minimizes per-step
    overhead).
    """
    pad8 = lambda c: ((c + 7) // 8) * 8           # sublane padding
    per_col = 2 * (pad8(C_in) + pad8(C_out)) * dtype_bytes
    cap = vmem_budget_bytes // max(per_col, 1)
    cap = max(128, min(cap, max_tile))
    cap = (cap // 128) * 128
    if T <= cap:
        return T
    return cap


def pointwise_conv1d(x, weight, bias, stride: int = 1, padding: int = 0,
                     tile_t: int | None = None):
    """Pointwise (kernel_size=1) Conv1d.

    Args:
      x:      (B, C_in, T)        -- NCT, matching PyTorch Conv1d input.
      weight: (C_out, C_in, 1)    -- PyTorch Conv1d weight shape for kernel_size=1.
      bias:   (C_out,)
    Returns:
      (B, C_out, T_out) with T_out = floor((T + 2*padding - 1) / stride) + 1
    """
    B, C_in, T = x.shape
    C_out = weight.shape[0]

    # Glue JAX: with kernel_size=1, padding/stride are just pad + subsample.
    if padding:
        x = jnp.pad(x, ((0, 0), (0, 0), (padding, padding)))
    if stride != 1:
        x = x[:, :, ::stride]
    T_out = x.shape[2]

    w2d = weight[:, :, 0]              # (C_out, C_in)
    b2d = bias.reshape(C_out, 1)       # (C_out, 1)

    dtype_bytes = jnp.dtype(x.dtype).itemsize
    if tile_t is None:
        tile_t = _choose_tile_t(T_out, C_in, C_out, dtype_bytes)
    grid = (B, pl.cdiv(T_out, tile_t))

    # Advisory cost estimate: memory-bound, flops = 2*B*T*C_in*C_out.
    bytes_accessed = (B * T_out * (C_in + C_out)) * dtype_bytes \
        + (C_out * C_in + C_out) * jnp.dtype(weight.dtype).itemsize
    cost = pl.CostEstimate(flops=2 * B * T_out * C_in * C_out,
                           transcendentals=0,
                           bytes_accessed=bytes_accessed)

    out = pl.pallas_call(
        _pointwise_conv_kernel,
        out_shape=jax.ShapeDtypeStruct((B, C_out, T_out), x.dtype),
        grid=grid,
        in_specs=[
            pl.BlockSpec((C_out, C_in), lambda b, t: (0, 0)),        # weights: resident
            pl.BlockSpec((C_out, 1), lambda b, t: (0, 0)),           # bias: resident
            pl.BlockSpec((None, C_in, tile_t), lambda b, t: (b, 0, t)),  # x: per-batch, tiled over T
        ],
        out_specs=pl.BlockSpec((None, C_out, tile_t), lambda b, t: (b, 0, t)),
        compiler_params=pltpu.CompilerParams(
            dimension_semantics=("parallel", "parallel"),  # shard batch/time across cores
            vmem_limit_bytes=32 * 1024 * 1024,             # safe on v5e/v6e/v7x
        ),
        cost_estimate=cost,
    )(w2d, b2d, x)

    return out


def _reference(x, weight, bias, stride: int = 1, padding: int = 0):
    if padding:
        x = jnp.pad(x, ((0, 0), (0, 0), (padding, padding)))
    if stride != 1:
        x = x[:, :, ::stride]
    return jnp.einsum("oc,bct->bot", weight[:, :, 0], x) + bias[None, :, None]


if __name__ == "__main__":
    # Small shapes consistent with the module's forward: (batch, in_channels, time)
    B, C_IN, C_OUT, T = 2, 4, 8, 16

    key = jax.random.PRNGKey(0)
    kx, kw, kb = jax.random.split(key, 3)

    x = jax.random.normal(kx, (B, C_IN, T), dtype=jnp.float32)

    # PyTorch Conv1d parameter shapes: weight (C_out, C_in, 1), bias (C_out,).
    fan_in = C_IN * 1
    bound = 1.0 / (fan_in ** 0.5)
    weight = jax.random.uniform(kw, (C_OUT, C_IN, 1), dtype=jnp.float32,
                                minval=-bound, maxval=bound)
    bias = jax.random.uniform(kb, (C_OUT,), dtype=jnp.float32,
                              minval=-bound, maxval=bound)

    # 1) Primary small-shape check (single tile per batch).
    out = pointwise_conv1d(x, weight, bias, stride=1, padding=0)
    out = jax.block_until_ready(out)
    ref = _reference(x, weight, bias)
    assert out.shape == (B, C_OUT, T), out.shape
    assert jnp.allclose(out, ref, atol=1e-5, rtol=1e-5)

    # 2) Multi-tile + ragged-tail check (exercises the time grid + padded last block).
    T2 = 200  # grid = (B, 2) with tile_t=128 and a ragged tail
    x2 = jax.random.normal(jax.random.PRNGKey(1), (B, C_IN, T2), dtype=jnp.float32)
    out2 = pointwise_conv1d(x2, weight, bias, stride=1, padding=0, tile_t=128)
    out2 = jax.block_until_ready(out2)
    ref2 = _reference(x2, weight, bias)
    assert out2.shape == (B, C_OUT, T2), out2.shape
    assert jnp.allclose(out2, ref2, atol=1e-5, rtol=1e-5)

    # 3) Stride/padding path (glue-JAX handled, kernel unchanged).
    out3 = pointwise_conv1d(x2, weight, bias, stride=2, padding=1)
    out3 = jax.block_until_ready(out3)
    ref3 = _reference(x2, weight, bias, stride=2, padding=1)
    assert out3.shape == ref3.shape, (out3.shape, ref3.shape)
    assert jnp.allclose(out3, ref3, atol=1e-5, rtol=1e-5)

    print("KERNEL_OK")
</pallas_src>

<mosaic_0001>
module attributes {stable_mosaic.version = 11 : i64} {
  func.func @_pointwise_conv_kernel(%arg0: i32, %arg1: i32, %arg2: memref<8x4xf32, #tpu.memory_space<vmem>>, %arg3: memref<8x1xf32, #tpu.memory_space<vmem>>, %arg4: memref<1x4x16xf32, #tpu.memory_space<vmem>>, %arg5: memref<1x8x16xf32, #tpu.memory_space<vmem>>) attributes {dimension_semantics = [#tpu.dimension_semantics<parallel>, #tpu.dimension_semantics<parallel>], iteration_bounds = array<i64: 2, 1>, scalar_prefetch = 0 : i64, scratch_operands = 0 : i64, tpu.core_type = #tpu.core_type<tc>, window_params = [{pipeline_mode = #tpu.pipeline_mode<synchronous>, transform_indices = @transform_0, window_bounds = array<i64: 8, 4>}, {pipeline_mode = #tpu.pipeline_mode<synchronous>, transform_indices = @transform_1, window_bounds = array<i64: 8, 1>}, {transform_indices = @transform_2, window_bounds = array<i64: 1, 4, 16>}, {transform_indices = @transform_3, window_bounds = array<i64: 1, 8, 16>}]} {
    %c0 = arith.constant 0 : index
    %c0_0 = arith.constant 0 : index
    %0 = vector.load %arg2[%c0, %c0_0] : memref<8x4xf32, #tpu.memory_space<vmem>>, vector<8x4xf32>
    %c0_1 = arith.constant 0 : index
    %c0_2 = arith.constant 0 : index
    %c0_3 = arith.constant 0 : index
    %1 = vector.load %arg4[%c0_1, %c0_2, %c0_3] : memref<1x4x16xf32, #tpu.memory_space<vmem>>, vector<1x4x16xf32>
    %2 = vector.shape_cast %1 : vector<1x4x16xf32> to vector<4x16xf32>
    %cst = arith.constant dense<0.000000e+00> : vector<8x16xf32>
    %3 = tpu.matmul %0, %2, %cst {dimension_numbers = #tpu.dot_dimension_numbers<[1], [0], [0], [1], [0, 0, 1, 1], [], []>} : vector<8x4xf32>, vector<4x16xf32>, vector<8x16xf32> -> vector<8x16xf32>
    %c0_4 = arith.constant 0 : index
    %c0_5 = arith.constant 0 : index
    %4 = vector.load %arg3[%c0_4, %c0_5] : memref<8x1xf32, #tpu.memory_space<vmem>>, vector<8x1xf32>
    %5 = vector.broadcast %4 : vector<8x1xf32> to vector<8x16xf32>
    %6 = arith.addf %3, %5 : vector<8x16xf32>
    %c0_6 = arith.constant 0 : index
    %c0_7 = arith.constant 0 : index
    %c0_8 = arith.constant 0 : index
    %7 = vector.load %arg5[%c0_6, %c0_7, %c0_8] : memref<1x8x16xf32, #tpu.memory_space<vmem>>, vector<1x8x16xf32>
    %8 = vector.shape_cast %7 : vector<1x8x16xf32> to vector<8x16xf32>
    %9 = vector.shape_cast %6 : vector<8x16xf32> to vector<1x8x16xf32>
    tpu.vector_store %arg5[%c0_6, %c0_7, %c0_8], %9 {strides = array<i32>} : memref<1x8x16xf32, #tpu.memory_space<vmem>>, vector<1x8x16xf32>,
    return
  }
  func.func @transform_0(%arg0: i32, %arg1: i32) -> (i32, i32) {
    %c0_i32 = arith.constant 0 : i32
    %c0_i32_0 = arith.constant 0 : i32
    %c0_i32_1 = arith.constant 0 : i32
    return %c0_i32, %c0_i32_0 : i32, i32
  }
  func.func @transform_1(%arg0: i32, %arg1: i32) -> (i32, i32) {
    %c0_i32 = arith.constant 0 : i32
    %c0_i32_0 = arith.constant 0 : i32
    %c0_i32_1 = arith.constant 0 : i32
    return %c0_i32, %c0_i32_0 : i32, i32
  }
  func.func @transform_2(%arg0: i32, %arg1: i32) -> (i32, i32, i32) {
    %c0_i32 = arith.constant 0 : i32
    %c0_i32_0 = arith.constant 0 : i32
    return %arg0, %c0_i32, %arg1 : i32, i32, i32
  }
  func.func @transform_3(%arg0: i32, %arg1: i32) -> (i32, i32, i32) {
    %c0_i32 = arith.constant 0 : i32
    %c0_i32_0 = arith.constant 0 : i32
    return %arg0, %c0_i32, %arg1 : i32, i32, i32
  }
}

</mosaic_0001>

<llo_original>
// kernel: tpu_custom_call.1
$region0: #{tpu_custom_call.1}
  #allocation0 [shape = 'u32[]', space=smem, size = 0x4, offset = 0x4, fixed_abs, tag = 'smem constant byte address 0x4 - core index']
  #allocation1 [shape = 'u32[144,128]{1,0:T(1,128)}', space=vmem, size = 0x12000, scoped, tag = 'internal scratch']
  %s0 = inlined_call_operand.vmem [shape: f32[8,4], index: 0, kind: input, shape index: {}]
  %s1 = inlined_call_operand.vmem [shape: f32[8,1], index: 1, kind: input, shape index: {}]
  %s2 = inlined_call_operand.vmem [shape: f32[2,4,16], index: 2, kind: input, shape index: {}]
  %s3 = inlined_call_operand.hbm [shape: f32[2,8,16], index: 3, kind: output, shape index: {}]
  %s4 = sld [smem:[#allocation0]]
  $region45: #{tpu_custom_call.1} parent=0
    _
  %s6 = ssub.s32 1, %s4
  %s7 = scalar_select 0, %s6, %s4
  $region1: #{tpu_custom_call.1} parent=0
    #allocation2 [shape = 'u8[8192]{0}', space=vmem, size = 0x2000, scoped, tag = 'output window, operand 0']
    #allocation3 [shape = 's32[2]{0}', space=sflag, size = 0x8, scoped, tag = 'scoped memory for tpu_custom_call.1']
    %8 = vsyncpa [#allocation3], 0
    %s9 = scalar_lea.sflag [#allocation3], 1
    %10 = vsyncpa %s9, 0
    loop: start=0, step=1, limit=4
    $region2: #{tpu_custom_call.1} parent=1 // loop_pre_header
      _
    $region3: #{tpu_custom_call.1} parent=1 // loop_header
      %s12 = sphi 0, %s16
      %p13 = scmp.ge.s32.totalorder %s12, 4
      %s19 = sphi 0, %s31
      %s20 = sphi 0, %s27
      %s21 = sphi 0, %s19
      %s22 = sphi 0, %s20
      %s23 = sphi 0, %s21
      %s24 = sphi 0, %s22
      %s32 = sphi 0, %s32
      %s34 = sphi 0, %s32
      %s35 = sphi 0, %s34
      %s49 = sphi 0, %s35
      %s53 = sphi 0, %s53
      %s55 = sphi 0, %s53
      %s56 = sphi 0, %s55
      %s70 = sphi 0, %s56
      %s78 = sphi 0, %s80
      %s81 = sphi 0, %s78
      %s82 = sphi 0, %s81
      %s98 = sphi 0, %s82
      %s106 = sphi 0, %s108
      %s109 = sphi 0, %s106
      %s110 = sphi 0, %s109
      %s126 = sphi 0, %s110
    $region4: #{tpu_custom_call.1} parent=1 // loop_header_branch
      %15 = sbr.rel (%p13) target = $region8
    $region5: #{tpu_custom_call.1} parent=1 // loop_body
      %s17 = ssub.s32 %s12, 1
      %s18 = ssub.s32 %s12, 2
      %s25 = sadd.s32 1, %s20
      %p26 = scmp.ge.s32.totalorder %s25, 1
      %s27 = scalar_select %p26, 0, %s25
      %s28 = sadd.s32 1, %s19
      %s29 = scalar_select %p26, %s28, %s19
      %p30 = scmp.ge.s32.totalorder %s29, 2
      %s31 = scalar_select %p30, 0, %s29
      %s33 = sadd.s32 %s32, 1
      %p36 = scmp.eq.s32.totalorder %s12, 1
      %p37 = scmp.ne.s32.totalorder %s32, %s34
      %p38 = scmp.eq.s32.totalorder %s12, 0
      %p39 = por %p37, %p38
      %p40 = scmp.ne.s32.totalorder %s32, %s34
      %p41 = scmp.eq.s32.totalorder %s17, 1
      %p42 = por %p40, %p41
      %p43 = scmp.ne.s32.totalorder %s34, %s35
      %p44 = scmp.eq.s32.totalorder %s17, 0
      %p45 = por %p43, %p44
      %p46 = scmp.ne.s32.totalorder %s34, %s35
      %p47 = scmp.eq.s32.totalorder %s18, 1
      %p48 = por %p46, %p47
      %p50 = scmp.ne.s32.totalorder %s35, %s49
      %p51 = scmp.eq.s32.totalorder %s18, 0
      %p52 = por %p50, %p51
      %s54 = sadd.s32 %s53, 1
      %p57 = scmp.eq.s32.totalorder %s12, 1
      %p58 = scmp.ne.s32.totalorder %s53, %s55
      %p59 = scmp.eq.s32.totalorder %s12, 0
      %p60 = por %p58, %p59
      %p61 = scmp.ne.s32.totalorder %s53, %s55
      %p62 = scmp.eq.s32.totalorder %s17, 1
      %p63 = por %p61, %p62
      %p64 = scmp.ne.s32.totalorder %s55, %s56
      %p65 = scmp.eq.s32.totalorder %s17, 0
      %p66 = por %p64, %p65
      %p67 = scmp.ne.s32.totalorder %s55, %s56
      %p68 = scmp.eq.s32.totalorder %s18, 1
      %p69 = por %p67, %p68
      %p71 = scmp.ne.s32.totalorder %s56, %s70
      %p72 = scmp.eq.s32.totalorder %s18, 0
      %p73 = por %p71, %p72
      %s74 = ssub.s32 %s19, %s31
      %s75 = ssub.s32 %s20, %s27
      %s76 = sor.u32 %s74, %s75
      %p77 = scmp.eq.s32.totalorder %s76, 0
      %s79 = sadd.s32 %s78, 1
      %s80 = scalar_select %p77, %s78, %s79
      %p83 = pneg %p77
      %p84 = scmp.eq.s32.totalorder %s12, 1
      %p85 = por %p83, %p84
      %p86 = scmp.ne.s32.totalorder %s78, %s81
      %p87 = scmp.eq.s32.totalorder %s12, 0
      %p88 = por %p86, %p87
      %p89 = scmp.ne.s32.totalorder %s78, %s81
      %p90 = scmp.eq.s32.totalorder %s17, 1
      %p91 = por %p89, %p90
      %p92 = scmp.ne.s32.totalorder %s81, %s82
      %p93 = scmp.eq.s32.totalorder %s17, 0
      %p94 = por %p92, %p93
      %p95 = scmp.ne.s32.totalorder %s81, %s82
      %p96 = scmp.eq.s32.totalorder %s18, 1
      %p97 = por %p95, %p96
      %p99 = scmp.ne.s32.totalorder %s82, %s98
      %p100 = scmp.eq.s32.totalorder %s18, 0
      %p101 = por %p99, %p100
      %s102 = ssub.s32 %s19, %s31
      %s103 = ssub.s32 %s20, %s27
      %s104 = sor.u32 %s102, %s103
      %p105 = scmp.eq.s32.totalorder %s104, 0
      %s107 = sadd.s32 %s106, 1
      %s108 = scalar_select %p105, %s106, %s107
      %p111 = pneg %p105
      %p112 = scmp.eq.s32.totalorder %s12, 1
      %p113 = por %p111, %p112
      %p114 = scmp.ne.s32.totalorder %s106, %s109
      %p115 = scmp.eq.s32.totalorder %s12, 0
      %p116 = por %p114, %p115
      %p117 = scmp.ne.s32.totalorder %s106, %s109
      %p118 = scmp.eq.s32.totalorder %s17, 1
      %p119 = por %p117, %p118
      %p120 = scmp.ne.s32.totalorder %s109, %s110
      %p121 = scmp.eq.s32.totalorder %s17, 0
      %p122 = por %p120, %p121
      %p123 = scmp.ne.s32.totalorder %s109, %s110
      %p124 = scmp.eq.s32.totalorder %s18, 1
      %p125 = por %p123, %p124
      %p127 = scmp.ne.s32.totalorder %s110, %s126
      %p128 = scmp.eq.s32.totalorder %s18, 0
      %p129 = por %p127, %p128
      %p130 = scmp.le.s32.totalorder 1, %s12
      %p131 = scmp.lt.s32.totalorder %s12, 3
      %p132 = pnand %p130, %p131
      %p133 = pneg %p132
      // Predicated region
      $region9: #{tpu_custom_call.1} parent=5 // pred_check
        _
      $region10: #{tpu_custom_call.1} parent=5 // pred_check_branch
        %135 = sbr.rel (%p132) target = $region12
      $region11: #{tpu_custom_call.1} parent=5 // pred_region
        %s136 = ssub.s32 %s12, 1
        // Predicated region
        $region13: #{tpu_custom_call.1} parent=11 // pred_check
          %p137 = pneg %p45
        $region14: #{tpu_custom_call.1} parent=11 // pred_check_branch
          %139 = sbr.rel (%p137) target = $region16
        $region15: #{tpu_custom_call.1} parent=11 // pred_region
          _
        $region16: #{tpu_custom_call.1} parent=11 // pred_fallthru
          _
        // Predicated region
        $region17: #{tpu_custom_call.1} parent=11 // pred_check
          %p140 = pneg %p66
        $region18: #{tpu_custom_call.1} parent=11 // pred_check_branch
          %142 = sbr.rel (%p140) target = $region20
        $region19: #{tpu_custom_call.1} parent=11 // pred_region
          _
        $region20: #{tpu_custom_call.1} parent=11 // pred_fallthru
          _
      $region12: #{tpu_custom_call.1} parent=5 // pred_fallthru
        _
      %p143 = scmp.lt.s32.totalorder %s12, 2
      // Predicated region
      $region21: #{tpu_custom_call.1} parent=5 // pred_check
        %p144 = pneg %p143
      $region22: #{tpu_custom_call.1} parent=5 // pred_check_branch
        %146 = sbr.rel (%p144) target = $region24
      $region23: #{tpu_custom_call.1} parent=5 // pred_region
        // Predicated region
        $region25: #{tpu_custom_call.1} parent=23 // pred_check
          %p147 = pneg %p88
        $region26: #{tpu_custom_call.1} parent=23 // pred_check_branch
          %149 = sbr.rel (%p147) target = $region28
        $region27: #{tpu_custom_call.1} parent=23 // pred_region
          %p150 = scmp.lt.s32.totalorder %s19, 1
          %s151 = scalar_select %p150, %s19, 1
          %p152 = scmp.lt.s32.totalorder %s20, 0
          %s153 = scalar_select %p152, %s20, 0
          %s154 = sadd.s32 %s153, %s151
          %s155 = smul.addr %s154, 4
          %s156 = scalar_lea.vmem %s2, %s155
        $region28: #{tpu_custom_call.1} parent=23 // pred_fallthru
          _
      $region24: #{tpu_custom_call.1} parent=5 // pred_fallthru
        _
      %p157 = scmp.le.s32.totalorder 1, %s12
      %p158 = scmp.lt.s32.totalorder %s12, 3
      %p159 = pnand %p157, %p158
      %p160 = pneg %p159
      // Predicated region
      $region29: #{tpu_custom_call.1} parent=5 // pred_check
        _
      $region30: #{tpu_custom_call.1} parent=5 // pred_check_branch
        %162 = sbr.rel (%p159) target = $region32
      $region31: #{tpu_custom_call.1} parent=5 // pred_region
        %s163 = ssub.s32 %s12, 1
        %p164 = pneg %p45
        %p165 = pneg %p42
        %p166 = pneg %p66
        %p167 = pneg %p63
        %p168 = scmp.lt.s32.totalorder %s21, 1
        %s169 = scalar_select %p168, %s21, 1
        %p170 = scmp.lt.s32.totalorder %s22, 0
        %s171 = scalar_select %p170, %s22, 0
        %s172 = sadd.s32 %s171, %s169
        %s173 = smul.addr %s172, 4
        %s174 = scalar_lea.vmem %s2, %s173
        %p175 = pneg %p94
        %p176 = pneg %p91
        %p177 = pneg %p122
        %p178 = pneg %p119
        %s179 = sand.u32 %s109, 1
        %s180 = scalar_lea.sflag [#allocation3], %s179
        %s181 = sand.u32 %s109, 1
        %s182 = smul.addr %s181, 8
        %s183 = scalar_lea.vmem [#allocation2], %s182
        %p184 = scmp.lt.s32.totalorder %s21, 1
        %s185 = scalar_select %p184, %s21, 1
        %p186 = scmp.lt.s32.totalorder %s22, 0
        %s187 = scalar_select %p186, %s22, 0
        %s188 = sadd.s32 %s187, %s185
        %s189 = smul.addr %s188, 4
        %s190 = scalar_lea.vmem %s2, %s189
        %v191 = vld [vmem:[%s0] sm:$0xff]
        %v192 = vld [vmem:[%s190] sm:$0xf]
        %v193 = vld [vmem:[%s1] sm:$0xff]
        %195 = vset.pattern.permute.xlu0 0
        %196 = vperm.xlu0 %195, %v193
        %v197 = vpop.permute.xlu0 %196
        %vm199 = vcmask 31744
        %v201 = vsel %vm199, %v191, 0
        %vm203 = vcmask 1043456
        %v205 = vsel %vm203, %v192, 0
        %207 = vmatprep.subr.mxu0 0.0
        %208 = vmatpush1.msra.mxu0 %v205
        %209 = vmatprep.subr.mxu0 0.0
        %210 = vmatpush1.msra.mxu0 0.0
        %211 = vmatprep.subr.mxu0 0.0
        %212 = vmatpush1.msra.mxu0 0.0
        %213 = vmatprep.subr.mxu0 0.0
        %214 = vmatpush1.msra.mxu0 0.0
        %215 = vmatprep.subr.mxu0 0.0
        %216 = vmatpush1.msra.mxu0 0.0
        %217 = vmatprep.subr.mxu0 0.0
        %218 = vmatpush1.msra.mxu0 0.0
        %219 = vmatprep.subr.mxu0 0.0
        %220 = vmatpush1.msra.mxu0 0.0
        %221 = vmatprep.subr.mxu0 0.0
        %222 = vmatpush1.msra.mxu0 0.0
        %223 = vmatprep.subr.mxu0 0.0
        %224 = vmatpush1.msra.mxu0 0.0
        %225 = vmatprep.subr.mxu0 0.0
        %226 = vmatpush1.msra.mxu0 0.0
        %227 = vmatprep.subr.mxu0 0.0
        %228 = vmatpush1.msra.mxu0 0.0
        %229 = vmatprep.subr.mxu0 0.0
        %230 = vmatpush1.msra.mxu0 0.0
        %231 = vmatprep.subr.mxu0 0.0
        %232 = vmatpush1.msra.mxu0 0.0
        %233 = vmatprep.subr.mxu0 0.0
        %234 = vmatpush1.msra.mxu0 0.0
        %235 = vmatprep.subr.mxu0 0.0
        %236 = vmatpush1.msra.mxu0 0.0
        %237 = vmatprep.subr.mxu0 0.0
        %238 = vmatpush1.msra.mxu0 0.0
        %239 = vmatprep.subr.mxu0 0.0
        %240 = vmatpush1.msra.mxu0 0.0
        %241 = vmatprep.subr.mxu0 0.0
        %242 = vmatpush1.msra.mxu0 0.0
        %243 = vmatprep.subr.mxu0 0.0
        %244 = vmatpush1.msra.mxu0 0.0
        %245 = vmatprep.subr.mxu0 0.0
        %246 = vmatpush1.msra.mxu0 0.0
        %247 = vmatprep.subr.mxu0 0.0
        %248 = vmatpush1.msra.mxu0 0.0
        %249 = vmatprep.subr.mxu0 0.0
        %250 = vmatpush1.msra.mxu0 0.0
        %251 = vmatprep.subr.mxu0 0.0
        %252 = vmatpush1.msra.mxu0 0.0
        %253 = vmatprep.subr.mxu0 0.0
        %254 = vmatpush1.msra.mxu0 0.0
        %255 = vmatprep.subr.mxu0 0.0
        %256 = vmatpush1.msra.mxu0 0.0
        %257 = vmatprep.subr.mxu0 0.0
        %258 = vmatpush1.msra.mxu0 0.0
        %259 = vmatprep.subr.mxu0 0.0
        %260 = vmatpush1.msra.mxu0 0.0
        %261 = vmatprep.subr.mxu0 0.0
        %262 = vmatpush1.msra.mxu0 0.0
        %263 = vmatprep.subr.mxu0 0.0
        %264 = vmatpush1.msra.mxu0 0.0
        %265 = vmatprep.subr.mxu0 0.0
        %266 = vmatpush1.msra.mxu0 0.0
        %267 = vmatprep.subr.mxu0 0.0
        %268 = vmatpush1.msra.mxu0 0.0
        %269 = vmatprep.subr.mxu0 0.0
        %270 = vmatpush1.msra.mxu0 0.0
        %271 = vmatprep.mubr.f32.mxu0 0.0
        %272 = vmatmul.mubr.f32.gmra.mrb[0].mxu0 %v201
        %v273 = vpop.f32.mrb[0].mxu0
        %v274 = vadd.f32 %v197, %v273
        %v275 = vpop.f32.mrb[0].mxu0
        %276 = vdwg.mxu0
        %vm277 = vcmask 130048
        %278 = vst.msk [vmem:[%s183] sm:$0xff] %vm277, %v274
        %s279 = sand.u32 %s109, 1
        %s280 = scalar_lea.sflag [#allocation3], %s279
        %s281 = sand.u32 %s109, 1
        %s282 = smul.addr %s281, 8
        %s283 = scalar_lea.vmem [#allocation2], %s282
        // Predicated region
        $region33: #{tpu_custom_call.1} parent=31 // pred_check
          %p284 = pneg %p119
        $region34: #{tpu_custom_call.1} parent=31 // pred_check_branch
          %286 = sbr.rel (%p284) target = $region36
        $region35: #{tpu_custom_call.1} parent=31 // pred_region
          %s288 = ssub.s32 128, 128
          %289 = vsyncadd %s280, %s288
          %s290 = sadd.s32 %s22, %s21
          %s291 = smul.addr %s290, 128
          %s292 = scalar_lea.hbm %s3, %s291
          %s294 = sshll.u32 %s283, 4
          %s295 = int_to_ptr.vmem [resolvable:$true] %s294
          %297 = dma.vmem_to_hbm [thread:$0]  %s295, 128, %s292, %s280
        $region36: #{tpu_custom_call.1} parent=31 // pred_fallthru
          _
      $region32: #{tpu_custom_call.1} parent=5 // pred_fallthru
        _
      %p298 = scmp.le.s32.totalorder 2, %s12
      // Predicated region
      $region37: #{tpu_custom_call.1} parent=5 // pred_check
        %p299 = pneg %p298
      $region38: #{tpu_custom_call.1} parent=5 // pred_check_branch
        %301 = sbr.rel (%p299) target = $region40
      $region39: #{tpu_custom_call.1} parent=5 // pred_region
        %s302 = ssub.s32 %s12, 2
        // Predicated region
        $region41: #{tpu_custom_call.1} parent=39 // pred_check
          %p303 = pneg %p125
        $region42: #{tpu_custom_call.1} parent=39 // pred_check_branch
          %305 = sbr.rel (%p303) target = $region44
        $region43: #{tpu_custom_call.1} parent=39 // pred_region
          %s306 = sand.u32 %s110, 1
          %s307 = scalar_lea.sflag [#allocation3], %s306
          %s308 = sand.u32 %s110, 1
          %s309 = smul.addr %s308, 8
          %s310 = scalar_lea.vmem [#allocation2], %s309
          %311 = dma.done %s307, 128
        $region44: #{tpu_custom_call.1} parent=39 // pred_fallthru
          _
      $region40: #{tpu_custom_call.1} parent=5 // pred_fallthru
        _
    $region6: #{tpu_custom_call.1} parent=1 // loop_footer
      %s16 = sadd.s32 1, %s12
    $region7: #{tpu_custom_call.1} parent=1 // loop_footer_branch
      %11 = sbr.rel target = $region3
    $region8: #{tpu_custom_call.1} parent=1 // loop_exit
      _
    %312 = vsyncpa [#allocation3], 1
    %s313 = scalar_lea.sflag [#allocation3], 1
    %314 = vsyncpa %s313, 1

</llo_original>
